<compile_context>
chip_gen: v5e
topology: v5e:2x2
jax: 0.10.0
libtpu: 0.0.40
codegen_flags: <defaults>
</compile_context>

<pallas_src>
import functools

import jax
import jax.numpy as jnp
from jax.experimental import pallas as pl
from jax.experimental.pallas import tpu as pltpu


def _round_up(x, m):
    return ((x + m - 1) // m) * m


# ----------------------------------------------------------------------------
# Fused kernel: spatial_level_module + image_level_module + avg-pool partials.
# Grid = (B, S_pad // TS).  Output block (8, C) is resident across the spatial
# ("arbitrary") axis and accumulates sublane-dense partial sums.
# ----------------------------------------------------------------------------
def fused_head_kernel(lr_ref, w1_ref, w12a_ref, b1_ref, w2b_ref, b2_ref,
                      out_ref):
    s = pl.program_id(1)

    @pl.when(s == 0)
    def _init():
        out_ref[...] = jnp.zeros_like(out_ref)

    LR_bf = lr_ref[...]                         # (2, TS, C) bf16 streamed rows
    _, TS, C = LR_bf.shape
    LR = LR_bf.astype(jnp.float32)              # gating math stays f32 (v5e VPU)
    b1 = b1_ref[...]                            # (1, C) f32
    b2 = b2_ref[...]                            # (1, C) f32

    # ---- spatial_level_module ----------------------------------------------
    # conv2d_1x1 is ONE shared module, so F_*_v == F_*_k == F_*_q and the two
    # gates sigmoid(F_left_k*F_right_q) / sigmoid(F_right_k*F_left_q) are the
    # same tensor -> compute once and broadcast over the leading-2 axis.
    F = (jnp.dot(LR_bf.reshape(2 * TS, C), w1_ref[...],
                 preferred_element_type=jnp.float32)
         .reshape(2, TS, C) + b1)                               # (2, TS, C)
    gate = jax.nn.sigmoid(F[0] * F[1])                          # (TS, C)
    X2 = LR * (F * gate)                                        # spatial_{l,r}

    # ---- image_level_module --------------------------------------------------
    # Fused RHS [W1 | W2a]: one MXU pass of X2 yields both alpha and the
    # x-part of beta (beta = cat([x, S_fea]) @ W4096 == x@W2a + S_fea@W2b).
    X2_bf = X2.astype(jnp.bfloat16)
    ab = (jnp.dot(X2_bf.reshape(2 * TS, C), w12a_ref[...],
                  preferred_element_type=jnp.float32)
          .reshape(2, TS, 2 * C))                               # (2, TS, 2C)
    alpha = ab[:, :, :C] + b1                                   # (2, TS, C)
    beta_x = ab[:, :, C:]                                       # (2, TS, C)

    S_fea = jnp.sum(X2 * (1.0 + alpha), axis=0)                 # (TS, C)
    beta_s = jnp.dot(S_fea.astype(jnp.bfloat16), w2b_ref[...],
                     preferred_element_type=jnp.float32)        # shared term
    beta = beta_x + beta_s + b2                                 # (2, TS, C)

    feat = jnp.sum(X2 * (alpha * beta + 1.0), axis=0)           # (TS, C)

    # ---- fused global-average-pool partial sums (sublane-dense accumulator) --
    # Zero-padded rows have X2 == 0, hence feat == 0: they contribute nothing.
    out_ref[...] += jnp.sum(feat.reshape(TS // 8, 8, C), axis=0)   # (8, C)


# ----------------------------------------------------------------------------
# One-time parameter prep (outside jit): bf16 MXU weights, fused [W1 | W2a].
# 1x1-conv weights are stored as (C_in, C_out) matrices.
# ----------------------------------------------------------------------------
def prepare_params(params):
    w1 = jnp.asarray(params["w1"], jnp.float32)
    w2a = jnp.asarray(params["w2a"], jnp.float32)
    w2b = jnp.asarray(params["w2b"], jnp.float32)
    return {
        "w1_bf16": w1.astype(jnp.bfloat16),
        "w12a_bf16": jnp.concatenate([w1, w2a], axis=1).astype(jnp.bfloat16),
        "w2b_bf16": w2b.astype(jnp.bfloat16),
        "b1": jnp.asarray(params["b1"], jnp.float32).reshape(1, -1),
        "b2": jnp.asarray(params["b2"], jnp.float32).reshape(1, -1),
        "wlin": jnp.asarray(params["wlin"], jnp.float32),
        "blin": jnp.asarray(params["blin"], jnp.float32).reshape(1, -1),
    }


# ----------------------------------------------------------------------------
# Wrapper
# ----------------------------------------------------------------------------
@functools.partial(jax.jit, static_argnames=("tile_spatial",))
def se_resnext50_spatial_image_head(left_nchw, right_nchw, prepared, *,
                                    tile_spatial=None):
    """left_nchw/right_nchw: backbone feature maps, shape (B, C, H, W)."""
    B, C, H, W = left_nchw.shape
    S = H * W

    # Generation-aware VMEM budget / spatial tile.
    try:
        info = pltpu.get_tpu_info()
        vmem_cap = int(getattr(info, "vmem_capacity_bytes", 64 * 1024 * 1024))
    except Exception:  # conservative fallback works on every generation
        vmem_cap = 64 * 1024 * 1024
    if vmem_cap <= 64 * 1024 * 1024:          # v7x-class: 64 MiB per TensorCore
        vmem_limit = 56 * 1024 * 1024
        default_ts = 128
    else:                                      # v5e / v6e: 128 MiB
        vmem_limit = 100 * 1024 * 1024
        default_ts = 256                       # pass tile_spatial=512 for huge S

    ts = default_ts if tile_spatial is None else tile_spatial
    ts = min(_round_up(ts, 16), _round_up(S, 16))   # 16: bf16 sublane packing
    S_pad = _round_up(S, ts)

    def to_rows(x):
        # TODO(synk): a real JAX pipeline would emit NHWC from the backbone;
        # this transpose is layout plumbing, not part of the kernel.
        r = jnp.transpose(x, (0, 2, 3, 1)).reshape(B, S, C).astype(jnp.bfloat16)
        if S_pad != S:
            r = jnp.pad(r, ((0, 0), (0, S_pad - S), (0, 0)))
        return r

    # Stacked left/right rows: one block per grid step, no in-kernel concat.
    lr = jnp.stack([to_rows(left_nchw), to_rows(right_nchw)], axis=1)  # (B,2,S_pad,C)

    def wspec(shape):
        # Grid-invariant operands: single-buffered (their index_map is constant,
        # double-buffering them would be pure VMEM waste at C=2048).
        return pl.BlockSpec(shape, lambda b, s: (0, 0),
                            pipeline_mode=pl.Buffered(1))

    partials = pl.pallas_call(
        fused_head_kernel,
        out_shape=jax.ShapeDtypeStruct((B, 8, C), jnp.float32),
        grid_spec=pltpu.PrefetchScalarGridSpec(
            num_scalar_prefetch=0,
            grid=(B, S_pad // ts),
            in_specs=[
                pl.BlockSpec((None, 2, ts, C), lambda b, s: (b, 0, s, 0)),  # L/R rows (bf16)
                wspec((C, C)),          # W1           (bf16)
                wspec((C, 2 * C)),      # [W1 | W2a]   (bf16)
                wspec((1, C)),          # b1           (f32)
                wspec((C, C)),          # W2b          (bf16)
                wspec((1, C)),          # b2           (f32)
            ],
            out_specs=pl.BlockSpec((None, 8, C), lambda b, s: (b, 0, 0)),
        ),
        compiler_params=pltpu.CompilerParams(
            dimension_semantics=("parallel", "arbitrary"),
            vmem_limit_bytes=vmem_limit,
        ),
    )(lr, prepared["w1_bf16"], prepared["w12a_bf16"], prepared["b1"],
      prepared["w2b_bf16"], prepared["b2"])

    # Global average pool finalize + last_linear in plain JAX (M=1 matmul is
    # MXU-hostile and Wlin would otherwise sit resident in VMEM).
    pooled = jnp.sum(partials, axis=1) * (1.0 / S)              # (B, C)
    logits = pooled @ prepared["wlin"] + prepared["blin"]       # (B, num_classes)
    return logits


# ----------------------------------------------------------------------------
# Pure-JAX reference of the same head (correctness checking only).  Inputs and
# matmul operands are quantized to bf16 exactly like the kernel does.
# ----------------------------------------------------------------------------
def _reference(left_nchw, right_nchw, params):
    B, C, H, W = left_nchw.shape
    to_rows = lambda x: jnp.transpose(x, (0, 2, 3, 1)).reshape(B, H * W, C)
    L = to_rows(left_nchw).astype(jnp.bfloat16).astype(jnp.float32)
    R = to_rows(right_nchw).astype(jnp.bfloat16).astype(jnp.float32)
    bf = lambda x: x.astype(jnp.bfloat16)
    w1, w2a, w2b = bf(params["w1"]), bf(params["w2a"]), bf(params["w2b"])
    mm = lambda x, w: jnp.einsum("bsc,cd->bsd", bf(x), w,
                                 preferred_element_type=jnp.float32)
    b1, b2 = params["b1"], params["b2"]

    FL = mm(L, w1) + b1
    FR = mm(R, w1) + b1
    gate_l = jax.nn.sigmoid(FL * FR)    # R_right2left
    gate_r = jax.nn.sigmoid(FR * FL)    # R_left2right (identical: shared conv)
    L2 = L * (FL * gate_l)
    R2 = R * (FR * gate_r)
    al = mm(L2, w1) + b1
    ar = mm(R2, w1) + b1
    S_fea = L2 + L2 * al + R2 + R2 * ar
    bl = mm(L2, w2a) + mm(S_fea, w2b) + b2
    br = mm(R2, w2a) + mm(S_fea, w2b) + b2
    out = L2 * (al * bl + 1.0) + R2 * (ar * br + 1.0)
    pooled = jnp.mean(out, axis=1)                              # (B, C)
    return pooled @ params["wlin"] + params["blin"]


if __name__ == "__main__":
    # Small, module-consistent shapes: backbone feature maps (B, C, H, W).
    B, C, H, W = 2, 128, 4, 4
    NUM_CLASSES = 40

    key = jax.random.PRNGKey(0)
    (k_left, k_right, k_w1, k_b1, k_w2, k_b2, k_wl, k_bl) = jax.random.split(key, 8)

    left_feat = jax.random.normal(k_left, (B, C, H, W), jnp.float32)
    right_feat = jax.random.normal(k_right, (B, C, H, W), jnp.float32)

    scale = 0.05
    w1 = scale * jax.random.normal(k_w1, (C, C), jnp.float32)            # conv2d_1x1
    b1 = 0.1 * jax.random.normal(k_b1, (1, C), jnp.float32)
    w2_full = scale * jax.random.normal(k_w2, (2 * C, C), jnp.float32)   # conv2d_1x1_4096
    w2a, w2b = w2_full[:C], w2_full[C:]
    b2 = 0.1 * jax.random.normal(k_b2, (1, C), jnp.float32)
    wlin = scale * jax.random.normal(k_wl, (C, NUM_CLASSES), jnp.float32)  # last_linear
    blin = 0.1 * jax.random.normal(k_bl, (1, NUM_CLASSES), jnp.float32)

    params = dict(w1=w1, b1=b1, w2a=w2a, w2b=w2b, b2=b2, wlin=wlin, blin=blin)
    prepared = prepare_params(params)   # one-time bf16 cast / weight fusion

    out = se_resnext50_spatial_image_head(left_feat, right_feat, prepared)
    out = jax.block_until_ready(out)

    ref = _reference(left_feat, right_feat, params)
    assert out.shape == (B, NUM_CLASSES)
    assert jnp.allclose(out, ref, rtol=2e-3, atol=2e-3), "mismatch vs reference"

    print("KERNEL_OK")
</pallas_src>

<mosaic_0001>
module attributes {stable_mosaic.version = 11 : i64} {
  func.func @fused_head_kernel(%arg0: i32, %arg1: i32, %arg2: memref<1x2x16x128xbf16, #tpu.memory_space<vmem>>, %arg3: memref<128x128xbf16, #tpu.memory_space<vmem>>, %arg4: memref<128x256xbf16, #tpu.memory_space<vmem>>, %arg5: memref<1x128xf32, #tpu.memory_space<vmem>>, %arg6: memref<128x128xbf16, #tpu.memory_space<vmem>>, %arg7: memref<1x128xf32, #tpu.memory_space<vmem>>, %arg8: memref<1x8x128xf32, #tpu.memory_space<vmem>>) attributes {dimension_semantics = [#tpu.dimension_semantics<parallel>, #tpu.dimension_semantics<arbitrary>], iteration_bounds = array<i64: 2, 1>, scalar_prefetch = 0 : i64, scratch_operands = 0 : i64, tpu.core_type = #tpu.core_type<tc>, window_params = [{transform_indices = @transform_0, window_bounds = array<i64: 1, 2, 16, 128>}, {pipeline_mode = #tpu.pipeline_mode<synchronous>, transform_indices = @transform_1, window_bounds = array<i64: 128, 128>}, {pipeline_mode = #tpu.pipeline_mode<synchronous>, transform_indices = @transform_2, window_bounds = array<i64: 128, 256>}, {pipeline_mode = #tpu.pipeline_mode<synchronous>, transform_indices = @transform_3, window_bounds = array<i64: 1, 128>}, {pipeline_mode = #tpu.pipeline_mode<synchronous>, transform_indices = @transform_4, window_bounds = array<i64: 128, 128>}, {pipeline_mode = #tpu.pipeline_mode<synchronous>, transform_indices = @transform_5, window_bounds = array<i64: 1, 128>}, {transform_indices = @transform_6, window_bounds = array<i64: 1, 8, 128>}]} {
    %c0_i32 = arith.constant 0 : i32
    %0 = arith.cmpi eq, %arg1, %c0_i32 : i32
    %1 = arith.extui %0 : i1 to i32
    %c0_i32_0 = arith.constant 0 : i32
    %2 = arith.cmpi ne, %1, %c0_i32_0 : i32
    scf.if %2 {
      %cst_28 = arith.constant 0.000000e+00 : f32
      %65 = vector.broadcast %cst_28 : f32 to vector<8x128xf32>
      %c0_29 = arith.constant 0 : index
      %c0_30 = arith.constant 0 : index
      %c0_31 = arith.constant 0 : index
      %66 = vector.load %arg8[%c0_29, %c0_30, %c0_31] : memref<1x8x128xf32, #tpu.memory_space<vmem>>, vector<1x8x128xf32>
      %67 = vector.shape_cast %66 : vector<1x8x128xf32> to vector<8x128xf32>
      %68 = vector.shape_cast %65 : vector<8x128xf32> to vector<1x8x128xf32>
      tpu.vector_store %arg8[%c0_29, %c0_30, %c0_31], %68 {strides = array<i32>} : memref<1x8x128xf32, #tpu.memory_space<vmem>>, vector<1x8x128xf32>,
    } else {
    }
    %c0 = arith.constant 0 : index
    %c0_1 = arith.constant 0 : index
    %c0_2 = arith.constant 0 : index
    %c0_3 = arith.constant 0 : index
    %3 = vector.load %arg2[%c0, %c0_1, %c0_2, %c0_3] : memref<1x2x16x128xbf16, #tpu.memory_space<vmem>>, vector<1x2x16x128xbf16>
    %4 = vector.shape_cast %3 : vector<1x2x16x128xbf16> to vector<2x16x128xbf16>
    %5 = arith.extf %4 : vector<2x16x128xbf16> to vector<2x16x128xf32>
    %c0_4 = arith.constant 0 : index
    %c0_5 = arith.constant 0 : index
    %6 = vector.load %arg5[%c0_4, %c0_5] : memref<1x128xf32, #tpu.memory_space<vmem>>, vector<1x128xf32>
    %c0_6 = arith.constant 0 : index
    %c0_7 = arith.constant 0 : index
    %7 = vector.load %arg7[%c0_6, %c0_7] : memref<1x128xf32, #tpu.memory_space<vmem>>, vector<1x128xf32>
    %8 = vector.shape_cast %4 : vector<2x16x128xbf16> to vector<32x128xbf16>
    %c0_8 = arith.constant 0 : index
    %c0_9 = arith.constant 0 : index
    %9 = vector.load %arg3[%c0_8, %c0_9] : memref<128x128xbf16, #tpu.memory_space<vmem>>, vector<128x128xbf16>
    %cst = arith.constant dense<0.000000e+00> : vector<32x128xf32>
    %10 = tpu.matmul %8, %9, %cst {dimension_numbers = #tpu.dot_dimension_numbers<[1], [0], [0], [1], [0, 0, 1, 1], [], []>} : vector<32x128xbf16>, vector<128x128xbf16>, vector<32x128xf32> -> vector<32x128xf32>
    %11 = vector.shape_cast %10 : vector<32x128xf32> to vector<2x16x128xf32>
    %12 = vector.shape_cast %6 : vector<1x128xf32> to vector<1x1x128xf32>
    %13 = vector.broadcast %12 : vector<1x1x128xf32> to vector<2x16x128xf32>
    %14 = arith.addf %11, %13 : vector<2x16x128xf32>
    %15 = vector.extract_strided_slice %14 {offsets = [0, 0, 0], sizes = [1, 16, 128], strides = [1, 1, 1]} : vector<2x16x128xf32> to vector<1x16x128xf32>
    %16 = vector.shape_cast %15 : vector<1x16x128xf32> to vector<16x128xf32>
    %17 = vector.extract_strided_slice %14 {offsets = [1, 0, 0], sizes = [1, 16, 128], strides = [1, 1, 1]} : vector<2x16x128xf32> to vector<1x16x128xf32>
    %18 = vector.shape_cast %17 : vector<1x16x128xf32> to vector<16x128xf32>
    %19 = arith.mulf %16, %18 : vector<16x128xf32>
    %20 = arith.negf %19 : vector<16x128xf32>
    %21 = math.exp %20 : vector<16x128xf32>
    %cst_10 = arith.constant 1.000000e+00 : f32
    %22 = vector.broadcast %cst_10 : f32 to vector<16x128xf32>
    %23 = arith.addf %22, %21 : vector<16x128xf32>
    %24 = arith.divf %22, %23 : vector<16x128xf32>
    %25 = vector.shape_cast %24 : vector<16x128xf32> to vector<1x16x128xf32>
    %26 = vector.broadcast %25 : vector<1x16x128xf32> to vector<2x16x128xf32>
    %27 = arith.mulf %14, %26 : vector<2x16x128xf32>
    %28 = arith.mulf %5, %27 : vector<2x16x128xf32>
    %29 = arith.truncf %28 : vector<2x16x128xf32> to vector<2x16x128xbf16>
    %30 = vector.shape_cast %29 : vector<2x16x128xbf16> to vector<32x128xbf16>
    %c0_11 = arith.constant 0 : index
    %c0_12 = arith.constant 0 : index
    %31 = vector.load %arg4[%c0_11, %c0_12] : memref<128x256xbf16, #tpu.memory_space<vmem>>, vector<128x256xbf16>
    %cst_13 = arith.constant dense<0.000000e+00> : vector<32x256xf32>
    %32 = tpu.matmul %30, %31, %cst_13 {dimension_numbers = #tpu.dot_dimension_numbers<[1], [0], [0], [1], [0, 0, 1, 1], [], []>} : vector<32x128xbf16>, vector<128x256xbf16>, vector<32x256xf32> -> vector<32x256xf32>
    %33 = vector.shape_cast %32 : vector<32x256xf32> to vector<2x16x256xf32>
    %34 = vector.extract_strided_slice %33 {offsets = [0, 0, 0], sizes = [2, 16, 128], strides = [1, 1, 1]} : vector<2x16x256xf32> to vector<2x16x128xf32>
    %35 = vector.shape_cast %6 : vector<1x128xf32> to vector<1x1x128xf32>
    %36 = vector.broadcast %35 : vector<1x1x128xf32> to vector<2x16x128xf32>
    %37 = arith.addf %34, %36 : vector<2x16x128xf32>
    %38 = vector.extract_strided_slice %33 {offsets = [0, 0, 128], sizes = [2, 16, 128], strides = [1, 1, 1]} : vector<2x16x256xf32> to vector<2x16x128xf32>
    %cst_14 = arith.constant 1.000000e+00 : f32
    %39 = vector.broadcast %cst_14 : f32 to vector<2x16x128xf32>
    %40 = arith.addf %39, %37 : vector<2x16x128xf32>
    %41 = arith.mulf %28, %40 : vector<2x16x128xf32>
    %cst_15 = arith.constant dense<0.000000e+00> : vector<16x128xf32>
    %42 = vector.multi_reduction <add>, %41, %cst_15 [0] : vector<2x16x128xf32> to vector<16x128xf32>
    %43 = arith.truncf %42 : vector<16x128xf32> to vector<16x128xbf16>
    %c0_16 = arith.constant 0 : index
    %c0_17 = arith.constant 0 : index
    %44 = vector.load %arg6[%c0_16, %c0_17] : memref<128x128xbf16, #tpu.memory_space<vmem>>, vector<128x128xbf16>
    %cst_18 = arith.constant dense<0.000000e+00> : vector<16x128xf32>
    %45 = tpu.matmul %43, %44, %cst_18 {dimension_numbers = #tpu.dot_dimension_numbers<[1], [0], [0], [1], [0, 0, 1, 1], [], []>} : vector<16x128xbf16>, vector<128x128xbf16>, vector<16x128xf32> -> vector<16x128xf32>
    %46 = vector.shape_cast %45 : vector<16x128xf32> to vector<1x16x128xf32>
    %47 = vector.broadcast %46 : vector<1x16x128xf32> to vector<2x16x128xf32>
    %48 = arith.addf %38, %47 : vector<2x16x128xf32>
    %49 = vector.shape_cast %7 : vector<1x128xf32> to vector<1x1x128xf32>
    %50 = vector.broadcast %49 : vector<1x1x128xf32> to vector<2x16x128xf32>
    %51 = arith.addf %48, %50 : vector<2x16x128xf32>
    %52 = arith.mulf %37, %51 : vector<2x16x128xf32>
    %cst_19 = arith.constant 1.000000e+00 : f32
    %53 = vector.broadcast %cst_19 : f32 to vector<2x16x128xf32>
    %54 = arith.addf %52, %53 : vector<2x16x128xf32>
    %55 = arith.mulf %28, %54 : vector<2x16x128xf32>
    %cst_20 = arith.constant dense<0.000000e+00> : vector<16x128xf32>
    %56 = vector.multi_reduction <add>, %55, %cst_20 [0] : vector<2x16x128xf32> to vector<16x128xf32>
    %c0_21 = arith.constant 0 : index
    %c0_22 = arith.constant 0 : index
    %c0_23 = arith.constant 0 : index
    %57 = vector.load %arg8[%c0_21, %c0_22, %c0_23] : memref<1x8x128xf32, #tpu.memory_space<vmem>>, vector<1x8x128xf32>
    %58 = vector.shape_cast %57 : vector<1x8x128xf32> to vector<8x128xf32>
    %59 = vector.shape_cast %56 : vector<16x128xf32> to vector<2x8x128xf32>
    %cst_24 = arith.constant dense<0.000000e+00> : vector<8x128xf32>
    %60 = vector.multi_reduction <add>, %59, %cst_24 [0] : vector<2x8x128xf32> to vector<8x128xf32>
    %61 = arith.addf %58, %60 : vector<8x128xf32>
    %c0_25 = arith.constant 0 : index
    %c0_26 = arith.constant 0 : index
    %c0_27 = arith.constant 0 : index
    %62 = vector.load %arg8[%c0_25, %c0_26, %c0_27] : memref<1x8x128xf32, #tpu.memory_space<vmem>>, vector<1x8x128xf32>
    %63 = vector.shape_cast %62 : vector<1x8x128xf32> to vector<8x128xf32>
    %64 = vector.shape_cast %61 : vector<8x128xf32> to vector<1x8x128xf32>
    tpu.vector_store %arg8[%c0_25, %c0_26, %c0_27], %64 {strides = array<i32>} : memref<1x8x128xf32, #tpu.memory_space<vmem>>, vector<1x8x128xf32>,
    return
  }
  func.func @transform_0(%arg0: i32, %arg1: i32) -> (i32, i32, i32, i32) {
    %c0_i32 = arith.constant 0 : i32
    %c0_i32_0 = arith.constant 0 : i32
    %c0_i32_1 = arith.constant 0 : i32
    return %arg0, %c0_i32, %arg1, %c0_i32_0 : i32, i32, i32, i32
  }
  func.func @transform_1(%arg0: i32, %arg1: i32) -> (i32, i32) {
    %c0_i32 = arith.constant 0 : i32
    %c0_i32_0 = arith.constant 0 : i32
    %c0_i32_1 = arith.constant 0 : i32
    return %c0_i32, %c0_i32_0 : i32, i32
  }
  func.func @transform_2(%arg0: i32, %arg1: i32) -> (i32, i32) {
    %c0_i32 = arith.constant 0 : i32
    %c0_i32_0 = arith.constant 0 : i32
    %c0_i32_1 = arith.constant 0 : i32
    return %c0_i32, %c0_i32_0 : i32, i32
  }
  func.func @transform_3(%arg0: i32, %arg1: i32) -> (i32, i32) {
    %c0_i32 = arith.constant 0 : i32
    %c0_i32_0 = arith.constant 0 : i32
    %c0_i32_1 = arith.constant 0 : i32
    return %c0_i32, %c0_i32_0 : i32, i32
  }
  func.func @transform_4(%arg0: i32, %arg1: i32) -> (i32, i32) {
    %c0_i32 = arith.constant 0 : i32
    %c0_i32_0 = arith.constant 0 : i32
    %c0_i32_1 = arith.constant 0 : i32
    return %c0_i32, %c0_i32_0 : i32, i32
  }
  func.func @transform_5(%arg0: i32, %arg1: i32) -> (i32, i32) {
    %c0_i32 = arith.constant 0 : i32
    %c0_i32_0 = arith.constant 0 : i32
    %c0_i32_1 = arith.constant 0 : i32
    return %c0_i32, %c0_i32_0 : i32, i32
  }
  func.func @transform_6(%arg0: i32, %arg1: i32) -> (i32, i32, i32) {
    %c0_i32 = arith.constant 0 : i32
    %c0_i32_0 = arith.constant 0 : i32
    %c0_i32_1 = arith.constant 0 : i32
    return %arg0, %c0_i32, %c0_i32_0 : i32, i32, i32
  }
}

</mosaic_0001>

<llo_original>
// kernel: se_resnext50_spatial_image_head.1
$region0: #{se_resnext50_spatial_image_head.1}
  #allocation0 [shape = 'u32[]', space=smem, size = 0x4, offset = 0x4, fixed_abs, tag = 'smem constant byte address 0x4 - core index']
  #allocation1 [shape = 'u32[72,128]{1,0:T(1,128)}', space=vmem, size = 0x9000, scoped, tag = 'internal scratch']
  %s0 = inlined_call_operand.vmem [shape: bf16[2,2,16,128], index: 0, kind: input, shape index: {}]
  %s1 = inlined_call_operand.hbm [shape: bf16[128,128], index: 1, kind: input, shape index: {}]
  %s2 = inlined_call_operand.vmem [shape: bf16[128,256], index: 2, kind: input, shape index: {}]
  %s3 = inlined_call_operand.vmem [shape: f32[1,128], index: 3, kind: input, shape index: {}]
  %s4 = inlined_call_operand.hbm [shape: bf16[128,128], index: 4, kind: input, shape index: {}]
  %s5 = inlined_call_operand.vmem [shape: f32[1,128], index: 5, kind: input, shape index: {}]
  %s6 = inlined_call_operand.vmem [shape: f32[2,8,128], index: 6, kind: output, shape index: {}]
  %s7 = sld [smem:[#allocation0]]
  $region69: #{se_resnext50_spatial_image_head.1} parent=0
    _
  %s9 = ssub.s32 1, %s7
  %s10 = scalar_select 0, %s9, %s7
  $region1: #{se_resnext50_spatial_image_head.1} parent=0
    #allocation2 [shape = 'u8[32768]{0}', space=vmem, size = 0x8000, scoped, tag = 'input window, operand 1, single buffered']
    #allocation3 [shape = 's32[2]{0}', space=sflag, size = 0x8, scoped, tag = 'scoped memory for se_resnext50_spatial_image_head.1']
    #allocation4 [shape = 'u8[32768]{0}', space=vmem, size = 0x8000, scoped, tag = 'input window, operand 4, single buffered']
    #allocation5 [shape = 's32[1]{0}', space=sflag, size = 0x4, scoped, tag = 'scoped memory for se_resnext50_spatial_image_head.1']
    %11 = vsyncpa [#allocation3], 0
    %12 = vsyncpa [#allocation5], 0
    loop: start=0, step=1, limit=4
    $region2: #{se_resnext50_spatial_image_head.1} parent=1 // loop_pre_header
      _
    $region3: #{se_resnext50_spatial_image_head.1} parent=1 // loop_header
      %s14 = sphi 0, %s18
      %p15 = scmp.ge.s32.totalorder %s14, 4
      %s21 = sphi 0, %s33
      %s22 = sphi 0, %s29
      %s23 = sphi 0, %s21
      %s24 = sphi 0, %s22
      %s25 = sphi 0, %s23
      %s26 = sphi 0, %s24
      %s38 = sphi 0, %s40
      %s41 = sphi 0, %s38
      %s42 = sphi 0, %s41
      %s58 = sphi 0, %s42
      %s62 = sphi 0, %s62
      %s64 = sphi 0, %s62
      %s65 = sphi 0, %s64
      %s79 = sphi 0, %s65
      %s83 = sphi 0, %s83
      %s85 = sphi 0, %s83
      %s86 = sphi 0, %s85
      %s100 = sphi 0, %s86
      %s104 = sphi 0, %s104
      %s106 = sphi 0, %s104
      %s107 = sphi 0, %s106
      %s121 = sphi 0, %s107
      %s125 = sphi 0, %s125
      %s127 = sphi 0, %s125
      %s128 = sphi 0, %s127
      %s142 = sphi 0, %s128
      %s146 = sphi 0, %s146
      %s148 = sphi 0, %s146
      %s149 = sphi 0, %s148
      %s163 = sphi 0, %s149
      %s169 = sphi 0, %s171
      %s172 = sphi 0, %s169
      %s173 = sphi 0, %s172
      %s189 = sphi 0, %s173
    $region4: #{se_resnext50_spatial_image_head.1} parent=1 // loop_header_branch
      %17 = sbr.rel (%p15) target = $region8
    $region5: #{se_resnext50_spatial_image_head.1} parent=1 // loop_body
      %s19 = ssub.s32 %s14, 1
      %s20 = ssub.s32 %s14, 2
      %s27 = sadd.s32 1, %s22
      %p28 = scmp.ge.s32.totalorder %s27, 1
      %s29 = scalar_select %p28, 0, %s27
      %s30 = sadd.s32 1, %s21
      %s31 = scalar_select %p28, %s30, %s21
      %p32 = scmp.ge.s32.totalorder %s31, 2
      %s33 = scalar_select %p32, 0, %s31
      %s34 = ssub.s32 %s21, %s33
      %s35 = ssub.s32 %s22, %s29
      %s36 = sor.u32 %s34, %s35
      %p37 = scmp.eq.s32.totalorder %s36, 0
      %s39 = sadd.s32 %s38, 1
      %s40 = scalar_select %p37, %s38, %s39
      %p43 = pneg %p37
      %p44 = scmp.eq.s32.totalorder %s14, 1
      %p45 = por %p43, %p44
      %p46 = scmp.ne.s32.totalorder %s38, %s41
      %p47 = scmp.eq.s32.totalorder %s14, 0
      %p48 = por %p46, %p47
      %p49 = scmp.ne.s32.totalorder %s38, %s41
      %p50 = scmp.eq.s32.totalorder %s19, 1
      %p51 = por %p49, %p50
      %p52 = scmp.ne.s32.totalorder %s41, %s42
      %p53 = scmp.eq.s32.totalorder %s19, 0
      %p54 = por %p52, %p53
      %p55 = scmp.ne.s32.totalorder %s41, %s42
      %p56 = scmp.eq.s32.totalorder %s20, 1
      %p57 = por %p55, %p56
      %p59 = scmp.ne.s32.totalorder %s42, %s58
      %p60 = scmp.eq.s32.totalorder %s20, 0
      %p61 = por %p59, %p60
      %s63 = sadd.s32 %s62, 1
      %p66 = scmp.eq.s32.totalorder %s14, 1
      %p67 = scmp.ne.s32.totalorder %s62, %s64
      %p68 = scmp.eq.s32.totalorder %s14, 0
      %p69 = por %p67, %p68
      %p70 = scmp.ne.s32.totalorder %s62, %s64
      %p71 = scmp.eq.s32.totalorder %s19, 1
      %p72 = por %p70, %p71
      %p73 = scmp.ne.s32.totalorder %s64, %s65
      %p74 = scmp.eq.s32.totalorder %s19, 0
      %p75 = por %p73, %p74
      %p76 = scmp.ne.s32.totalorder %s64, %s65
      %p77 = scmp.eq.s32.totalorder %s20, 1
      %p78 = por %p76, %p77
      %p80 = scmp.ne.s32.totalorder %s65, %s79
      %p81 = scmp.eq.s32.totalorder %s20, 0
      %p82 = por %p80, %p81
      %s84 = sadd.s32 %s83, 1
      %p87 = scmp.eq.s32.totalorder %s14, 1
      %p88 = scmp.ne.s32.totalorder %s83, %s85
      %p89 = scmp.eq.s32.totalorder %s14, 0
      %p90 = por %p88, %p89
      %p91 = scmp.ne.s32.totalorder %s83, %s85
      %p92 = scmp.eq.s32.totalorder %s19, 1
      %p93 = por %p91, %p92
      %p94 = scmp.ne.s32.totalorder %s85, %s86
      %p95 = scmp.eq.s32.totalorder %s19, 0
      %p96 = por %p94, %p95
      %p97 = scmp.ne.s32.totalorder %s85, %s86
      %p98 = scmp.eq.s32.totalorder %s20, 1
      %p99 = por %p97, %p98
      %p101 = scmp.ne.s32.totalorder %s86, %s100
      %p102 = scmp.eq.s32.totalorder %s20, 0
      %p103 = por %p101, %p102
      %s105 = sadd.s32 %s104, 1
      %p108 = scmp.eq.s32.totalorder %s14, 1
      %p109 = scmp.ne.s32.totalorder %s104, %s106
      %p110 = scmp.eq.s32.totalorder %s14, 0
      %p111 = por %p109, %p110
      %p112 = scmp.ne.s32.totalorder %s104, %s106
      %p113 = scmp.eq.s32.totalorder %s19, 1
      %p114 = por %p112, %p113
      %p115 = scmp.ne.s32.totalorder %s106, %s107
      %p116 = scmp.eq.s32.totalorder %s19, 0
      %p117 = por %p115, %p116
      %p118 = scmp.ne.s32.totalorder %s106, %s107
      %p119 = scmp.eq.s32.totalorder %s20, 1
      %p120 = por %p118, %p119
      %p122 = scmp.ne.s32.totalorder %s107, %s121
      %p123 = scmp.eq.s32.totalorder %s20, 0
      %p124 = por %p122, %p123
      %s126 = sadd.s32 %s125, 1
      %p129 = scmp.eq.s32.totalorder %s14, 1
      %p130 = scmp.ne.s32.totalorder %s125, %s127
      %p131 = scmp.eq.s32.totalorder %s14, 0
      %p132 = por %p130, %p131
      %p133 = scmp.ne.s32.totalorder %s125, %s127
      %p134 = scmp.eq.s32.totalorder %s19, 1
      %p135 = por %p133, %p134
      %p136 = scmp.ne.s32.totalorder %s127, %s128
      %p137 = scmp.eq.s32.totalorder %s19, 0
      %p138 = por %p136, %p137
      %p139 = scmp.ne.s32.totalorder %s127, %s128
      %p140 = scmp.eq.s32.totalorder %s20, 1
      %p141 = por %p139, %p140
      %p143 = scmp.ne.s32.totalorder %s128, %s142
      %p144 = scmp.eq.s32.totalorder %s20, 0
      %p145 = por %p143, %p144
      %s147 = sadd.s32 %s146, 1
      %p150 = scmp.eq.s32.totalorder %s14, 1
      %p151 = scmp.ne.s32.totalorder %s146, %s148
      %p152 = scmp.eq.s32.totalorder %s14, 0
      %p153 = por %p151, %p152
      %p154 = scmp.ne.s32.totalorder %s146, %s148
      %p155 = scmp.eq.s32.totalorder %s19, 1
      %p156 = por %p154, %p155
      %p157 = scmp.ne.s32.totalorder %s148, %s149
      %p158 = scmp.eq.s32.totalorder %s19, 0
      %p159 = por %p157, %p158
      %p160 = scmp.ne.s32.totalorder %s148, %s149
      %p161 = scmp.eq.s32.totalorder %s20, 1
      %p162 = por %p160, %p161
      %p164 = scmp.ne.s32.totalorder %s149, %s163
      %p165 = scmp.eq.s32.totalorder %s20, 0
      %p166 = por %p164, %p165
      %s167 = ssub.s32 %s21, %s33
      %p168 = scmp.eq.s32.totalorder %s167, 0
      %s170 = sadd.s32 %s169, 1
      %s171 = scalar_select %p168, %s169, %s170
      %p174 = pneg %p168
      %p175 = scmp.eq.s32.totalorder %s14, 1
      %p176 = por %p174, %p175
      %p177 = scmp.ne.s32.totalorder %s169, %s172
      %p178 = scmp.eq.s32.totalorder %s14, 0
      %p179 = por %p177, %p178
      %p180 = scmp.ne.s32.totalorder %s169, %s172
      %p181 = scmp.eq.s32.totalorder %s19, 1
      %p182 = por %p180, %p181
      %p183 = scmp.ne.s32.totalorder %s172, %s173
      %p184 = scmp.eq.s32.totalorder %s19, 0
      %p185 = por %p183, %p184
      %p186 = scmp.ne.s32.totalorder %s172, %s173
      %p187 = scmp.eq.s32.totalorder %s20, 1
      %p188 = por %p186, %p187
      %p190 = scmp.ne.s32.totalorder %s173, %s189
      %p191 = scmp.eq.s32.totalorder %s20, 0
      %p192 = por %p190, %p191
      %p193 = scmp.le.s32.totalorder 1, %s14
      %p194 = scmp.lt.s32.totalorder %s14, 3
      %p195 = pnand %p193, %p194
      %p196 = pneg %p195
      // Predicated region
      $region9: #{se_resnext50_spatial_image_head.1} parent=5 // pred_check
        _
      $region10: #{se_resnext50_spatial_image_head.1} parent=5 // pred_check_branch
        %198 = sbr.rel (%p195) target = $region12
      $region11: #{se_resnext50_spatial_image_head.1} parent=5 // pred_region
        %s199 = ssub.s32 %s14, 1
        // Predicated region
        $region13: #{se_resnext50_spatial_image_head.1} parent=11 // pred_check
          %p200 = pneg %p75
        $region14: #{se_resnext50_spatial_image_head.1} parent=11 // pred_check_branch
          %202 = sbr.rel (%p200) target = $region16
        $region15: #{se_resnext50_spatial_image_head.1} parent=11 // pred_region
          %204 = vsyncadd [#allocation3], 0
          %s205 = sshll.u32 %s1, 4
          %s206 = int_to_ptr.hbm [resolvable:$true] %s205
          %s207 = sshll.u32 [#allocation2], 4
          %s208 = int_to_ptr.vmem [resolvable:$true] %s207
          %213 = dma.hbm_to_vmem [thread:$0]  %s206, 1024, %s208, [#allocation3], 64, 64, 4
        $region16: #{se_resnext50_spatial_image_head.1} parent=11 // pred_fallthru
          _
        // Predicated region
        $region17: #{se_resnext50_spatial_image_head.1} parent=11 // pred_check
          %p214 = pneg %p96
        $region18: #{se_resnext50_spatial_image_head.1} parent=11 // pred_check_branch
          %216 = sbr.rel (%p214) target = $region20
        $region19: #{se_resnext50_spatial_image_head.1} parent=11 // pred_region
          _
        $region20: #{se_resnext50_spatial_image_head.1} parent=11 // pred_fallthru
          _
        // Predicated region
        $region21: #{se_resnext50_spatial_image_head.1} parent=11 // pred_check
          %p217 = pneg %p117
        $region22: #{se_resnext50_spatial_image_head.1} parent=11 // pred_check_branch
          %219 = sbr.rel (%p217) target = $region24
        $region23: #{se_resnext50_spatial_image_head.1} parent=11 // pred_region
          _
        $region24: #{se_resnext50_spatial_image_head.1} parent=11 // pred_fallthru
          _
        // Predicated region
        $region25: #{se_resnext50_spatial_image_head.1} parent=11 // pred_check
          %p220 = pneg %p138
        $region26: #{se_resnext50_spatial_image_head.1} parent=11 // pred_check_branch
          %222 = sbr.rel (%p220) target = $region28
        $region27: #{se_resnext50_spatial_image_head.1} parent=11 // pred_region
          %224 = vsyncadd [#allocation5], 0
          %s225 = sshll.u32 %s4, 4
          %s226 = int_to_ptr.hbm [resolvable:$true] %s225
          %s227 = sshll.u32 [#allocation4], 4
          %s228 = int_to_ptr.vmem [resolvable:$true] %s227
          %233 = dma.hbm_to_vmem [thread:$0]  %s226, 1024, %s228, [#allocation5], 64, 64, 4
        $region28: #{se_resnext50_spatial_image_head.1} parent=11 // pred_fallthru
          _
        // Predicated region
        $region29: #{se_resnext50_spatial_image_head.1} parent=11 // pred_check
          %p234 = pneg %p159
        $region30: #{se_resnext50_spatial_image_head.1} parent=11 // pred_check_branch
          %236 = sbr.rel (%p234) target = $region32
        $region31: #{se_resnext50_spatial_image_head.1} parent=11 // pred_region
          _
        $region32: #{se_resnext50_spatial_image_head.1} parent=11 // pred_fallthru
          _
      $region12: #{se_resnext50_spatial_image_head.1} parent=5 // pred_fallthru
        _
      %p237 = scmp.lt.s32.totalorder %s14, 2
      // Predicated region
      $region33: #{se_resnext50_spatial_image_head.1} parent=5 // pred_check
        %p238 = pneg %p237
      $region34: #{se_resnext50_spatial_image_head.1} parent=5 // pred_check_branch
        %240 = sbr.rel (%p238) target = $region36
      $region35: #{se_resnext50_spatial_image_head.1} parent=5 // pred_region
        // Predicated region
        $region37: #{se_resnext50_spatial_image_head.1} parent=35 // pred_check
          %p241 = pneg %p48
        $region38: #{se_resnext50_spatial_image_head.1} parent=35 // pred_check_branch
          %243 = sbr.rel (%p241) target = $region40
        $region39: #{se_resnext50_spatial_image_head.1} parent=35 // pred_region
          %s244 = smul.u32 2, %s22
          %p245 = scmp.lt.s32.totalorder %s21, 1
          %s246 = scalar_select %p245, %s21, 1
          %p247 = scmp.lt.s32.totalorder %s244, 1
          %s248 = scalar_select %p247, %s244, 1
          %s249 = smul.addr %s246, 4
          %s250 = sadd.s32 %s248, %s249
          %s251 = smul.addr %s250, 4
          %s252 = scalar_lea.vmem %s0, %s251
          %s253 = smul.u32 2, %s22
        $region40: #{se_resnext50_spatial_image_head.1} parent=35 // pred_fallthru
          _
      $region36: #{se_resnext50_spatial_image_head.1} parent=5 // pred_fallthru
        _
      %p254 = scmp.le.s32.totalorder 1, %s14
      %p255 = scmp.lt.s32.totalorder %s14, 3
      %p256 = pnand %p254, %p255
      %p257 = pneg %p256
      // Predicated region
      $region41: #{se_resnext50_spatial_image_head.1} parent=5 // pred_check
        _
      $region42: #{se_resnext50_spatial_image_head.1} parent=5 // pred_check_branch
        %259 = sbr.rel (%p256) target = $region44
      $region43: #{se_resnext50_spatial_image_head.1} parent=5 // pred_region
        %s260 = ssub.s32 %s14, 1
        // Predicated region
        $region45: #{se_resnext50_spatial_image_head.1} parent=43 // pred_check
          %p261 = pneg %p75
        $region46: #{se_resnext50_spatial_image_head.1} parent=43 // pred_check_branch
          %263 = sbr.rel (%p261) target = $region48
        $region47: #{se_resnext50_spatial_image_head.1} parent=43 // pred_region
          %265 = dma.done [#allocation3], 1024
        $region48: #{se_resnext50_spatial_image_head.1} parent=43 // pred_fallthru
          _
        // Predicated region
        $region49: #{se_resnext50_spatial_image_head.1} parent=43 // pred_check
          %p266 = pneg %p138
        $region50: #{se_resnext50_spatial_image_head.1} parent=43 // pred_check_branch
          %268 = sbr.rel (%p266) target = $region52
        $region51: #{se_resnext50_spatial_image_head.1} parent=43 // pred_region
          %270 = dma.done [#allocation5], 1024
        $region52: #{se_resnext50_spatial_image_head.1} parent=43 // pred_fallthru
          _
        %s271 = smul.u32 2, %s24
        %p272 = scmp.lt.s32.totalorder %s23, 1
        %s273 = scalar_select %p272, %s23, 1
        %p274 = scmp.lt.s32.totalorder %s271, 1
        %s275 = scalar_select %p274, %s271, 1
        %s276 = smul.addr %s273, 4
        %s277 = sadd.s32 %s275, %s276
        %s278 = smul.addr %s277, 4
        %s279 = scalar_lea.vmem %s0, %s278
        %p280 = pneg %p54
        %p281 = pneg %p51
        %p282 = pneg %p75
        %p283 = pneg %p72
        %p284 = pneg %p96
        %p285 = pneg %p93
        %p286 = pneg %p117
        %p287 = pneg %p114
        %p288 = pneg %p138
        %p289 = pneg %p135
        %p290 = pneg %p159
        %p291 = pneg %p156
        %p292 = pneg %p185
        %p293 = pneg %p182
        %p294 = scmp.lt.s32.totalorder %s23, 1
        %s295 = scalar_select %p294, %s23, 1
        %s296 = smul.addr %s295, 8
        %s297 = scalar_lea.vmem %s6, %s296
        %s298 = smul.u32 2, %s24
        %p299 = scmp.lt.s32.totalorder %s23, 1
        %s300 = scalar_select %p299, %s23, 1
        %p301 = scmp.lt.s32.totalorder %s298, 1
        %s302 = scalar_select %p301, %s298, 1
        %s303 = smul.addr %s300, 4
        %s304 = sadd.s32 %s302, %s303
        %s305 = smul.addr %s304, 4
        %s306 = scalar_lea.vmem %s0, %s305
        %s307 = smul.u32 2, %s24
        %p308 = scmp.lt.s32.totalorder %s23, 1
        %s309 = scalar_select %p308, %s23, 1
        %s310 = smul.addr %s309, 8
        %s311 = scalar_lea.vmem %s6, %s310
        %p312 = scmp.eq.s32.totalorder %s24, 0
        // Predicated region
        $region53: #{se_resnext50_spatial_image_head.1} parent=43 // pred_check
          %p313 = pneg %p312
        $region54: #{se_resnext50_spatial_image_head.1} parent=43 // pred_check_branch
          %315 = sbr.rel (%p313) target = $region56
        $region55: #{se_resnext50_spatial_image_head.1} parent=43 // pred_region
          %316 = vst [vmem:[%s311] sm:$0xff] 0.0
        $region56: #{se_resnext50_spatial_image_head.1} parent=43 // pred_fallthru
          _
        %v317 = vld [vmem:[%s306] sm:$0xf]
        %v318 = vld [vmem:[%s306 + $0x4] sm:$0xf]
        %v319 = vld [vmem:[%s306 + $0x8] sm:$0xf]
        %v320 = vld [vmem:[%s306 + $0xc] sm:$0xf]
        %v321 = vunpack.c.l.bf16 %v317
        %v322 = vunpack.c.l.bf16 %v318
        %v323 = vunpack.c.l.bf16 %v319
        %v324 = vunpack.c.l.bf16 %v320
        %v325 = vld [vmem:[%s3] sm:$0x1]
        %v326 = vld [vmem:[%s5] sm:$0x1]
        %v327 = vld [vmem:[#allocation2] sm:$0xf]
        %v328 = vld [vmem:[#allocation2 + $0x4] sm:$0xf]
        %v329 = vld [vmem:[#allocation2 + $0x8] sm:$0xf]
        %v330 = vld [vmem:[#allocation2 + $0xc] sm:$0xf]
        %v331 = vld [vmem:[#allocation2 + $0x10] sm:$0xf]
        %v332 = vld [vmem:[#allocation2 + $0x14] sm:$0xf]
        %v333 = vld [vmem:[#allocation2 + $0x18] sm:$0xf]
        %v334 = vld [vmem:[#allocation2 + $0x1c] sm:$0xf]
        %v335 = vld [vmem:[#allocation2 + $0x20] sm:$0xf]
        %v336 = vld [vmem:[#allocation2 + $0x24] sm:$0xf]
        %v337 = vld [vmem:[#allocation2 + $0x28] sm:$0xf]
        %v338 = vld [vmem:[#allocation2 + $0x2c] sm:$0xf]
        %v339 = vld [vmem:[#allocation2 + $0x30] sm:$0xf]
        %v340 = vld [vmem:[#allocation2 + $0x34] sm:$0xf]
        %v341 = vld [vmem:[#allocation2 + $0x38] sm:$0xf]
        %v342 = vld [vmem:[#allocation2 + $0x3c] sm:$0xf]
        %v347 = vunpack.c.l.b16 %v317
        %v348 = vunpack.c.l.b16 %v318
        %v349 = vunpack.c.l.b16 %v319
        %v350 = vunpack.c.l.b16 %v320
        %v351 = vpack.c.b16 %v348, %v347
        %v352 = vpack.c.b16 %v350, %v349
        %v371 = vunpack.c.l.b16 %v327
        %v372 = vunpack.c.l.b16 %v328
        %v373 = vunpack.c.l.b16 %v329
        %v374 = vunpack.c.l.b16 %v330
        %v375 = vunpack.c.l.b16 %v331
        %v376 = vunpack.c.l.b16 %v332
        %v377 = vunpack.c.l.b16 %v333
        %v378 = vunpack.c.l.b16 %v334
        %v379 = vunpack.c.l.b16 %v335
        %v380 = vunpack.c.l.b16 %v336
        %v381 = vunpack.c.l.b16 %v337
        %v382 = vunpack.c.l.b16 %v338
        %v383 = vunpack.c.l.b16 %v339
        %v384 = vunpack.c.l.b16 %v340
        %v385 = vunpack.c.l.b16 %v341
        %v386 = vunpack.c.l.b16 %v342
        %v387 = vpack.c.b16 %v372, %v371
        %v388 = vpack.c.b16 %v374, %v373
        %v389 = vpack.c.b16 %v376, %v375
        %v390 = vpack.c.b16 %v378, %v377
        %v391 = vpack.c.b16 %v380, %v379
        %v392 = vpack.c.b16 %v382, %v381
        %v393 = vpack.c.b16 %v384, %v383
        %v394 = vpack.c.b16 %v386, %v385
        %403 = vmatpush.bf16.msra.mxu0 %v394
        %404 = vmatpush.bf16.msra.mxu0 %v393
        %405 = vmatpush.bf16.msra.mxu0 %v392
        %406 = vmatpush.bf16.msra.mxu0 %v391
        %407 = vmatpush.bf16.msra.mxu0 %v390
        %408 = vmatpush.bf16.msra.mxu0 %v389
        %409 = vmatpush.bf16.msra.mxu0 %v388
        %410 = vmatpush.bf16.msra.mxu0 %v387
        %411 = vmatmul.bf16.gmra.mxu0 %v351
        %v412 = vpop.f32.mrf.mxu0
        %v413 = vadd.f32 0.0, %v412
        %v414 = vpop.f32.mrf.mxu0
        %v415 = vadd.f32 0.0, %v414
        %416 = vmatmul.bf16.gmra.mxu0 %v352
        %v417 = vpop.f32.mrf.mxu0
        %v418 = vadd.f32 0.0, %v417
        %v419 = vpop.f32.mrf.mxu0
        %v420 = vadd.f32 0.0, %v419
        %421 = vdwg.mxu0
        %v423 = vperm.slane %v325, 0
        %v425 = vadd.f32 %v413, %v423
        %v426 = vadd.f32 %v415, %v423
        %v427 = vadd.f32 %v418, %v423
        %v428 = vadd.f32 %v420, %v423
        %v429 = vmul.f32 %v425, %v427
        %v430 = vmul.f32 %v426, %v428
        %v431 = vxor.u32 %v429, 2147483648
        %v432 = vxor.u32 %v430, 2147483648
        %v433 = vmul.f32 %v431, 1.442695
        %v434 = vpow.pop %v433
        %v435 = vmul.f32 %v432, 1.442695
        %v436 = vpow.pop %v435
        %v437 = vadd.f32 %v434, 1.0
        %v438 = vadd.f32 %v436, 1.0
        %v439 = vrcp.pop %v437
        %v440 = vmul.f32 %v437, %v439
        %v441 = vsub.f32 1.0, %v440
        %v442 = vmul.f32 %v439, %v441
        %v443 = vadd.f32 %v439, %v442
        %vm444 = vweird.f32 %v437
        %vm445 = vweird.f32 %v439
        %vm446 = vmor %vm444, %vm445
        %v447 = vsel %vm446, %v439, %v443
        %v448 = vand.u32 2147483647, %v437
        %vm449 = vcmp.eq.f32.partialorder %v448, 8.507059e+37
        %v450 = vand.u32 %v437, 2147483648
        %v451 = vor.u32 1.1754944e-38, %v450
        %v452 = vsel %vm449, %v451, %v447
        %v453 = vmul.f32 1.0, %v452
        %v454 = vrcp.pop %v438
        %v455 = vmul.f32 %v438, %v454
        %v456 = vsub.f32 1.0, %v455
        %v457 = vmul.f32 %v454, %v456
        %v458 = vadd.f32 %v454, %v457
        %vm459 = vweird.f32 %v438
        %vm460 = vweird.f32 %v454
        %vm461 = vmor %vm459, %vm460
        %v462 = vsel %vm461, %v454, %v458
        %v463 = vand.u32 2147483647, %v438
        %vm464 = vcmp.eq.f32.partialorder %v463, 8.507059e+37
        %v465 = vand.u32 %v438, 2147483648
        %v466 = vor.u32 1.1754944e-38, %v465
        %v467 = vsel %vm464, %v466, %v462
        %v468 = vmul.f32 1.0, %v467
        %v469 = vmul.f32 %v425, %v453
        %v470 = vmul.f32 %v426, %v468
        %v471 = vmul.f32 %v427, %v453
        %v472 = vmul.f32 %v428, %v468
        %v473 = vmul.f32 %v321, %v469
        %v474 = vmul.f32 %v322, %v470
        %v475 = vmul.f32 %v323, %v471
        %v476 = vmul.f32 %v324, %v472
        %v477 = vpack.c.bf16 %v473, %v473
        %v478 = vpack.c.bf16 %v474, %v474
        %v479 = vpack.c.bf16 %v475, %v475
        %v480 = vpack.c.bf16 %v476, %v476
        %v481 = vld [vmem:[%s2] sm:$0xff]
        %v482 = vld [vmem:[%s2 + $0x8] sm:$0xff]
        %v483 = vld [vmem:[%s2 + $0x10] sm:$0xff]
        %v484 = vld [vmem:[%s2 + $0x18] sm:$0xff]
        %v485 = vld [vmem:[%s2 + $0x20] sm:$0xff]
        %v486 = vld [vmem:[%s2 + $0x28] sm:$0xff]
        %v487 = vld [vmem:[%s2 + $0x30] sm:$0xff]
        %v488 = vld [vmem:[%s2 + $0x38] sm:$0xff]
        %v489 = vld [vmem:[%s2 + $0x40] sm:$0xff]
        %v490 = vld [vmem:[%s2 + $0x48] sm:$0xff]
        %v491 = vld [vmem:[%s2 + $0x50] sm:$0xff]
        %v492 = vld [vmem:[%s2 + $0x58] sm:$0xff]
        %v493 = vld [vmem:[%s2 + $0x60] sm:$0xff]
        %v494 = vld [vmem:[%s2 + $0x68] sm:$0xff]
        %v495 = vld [vmem:[%s2 + $0x70] sm:$0xff]
        %v496 = vld [vmem:[%s2 + $0x78] sm:$0xff]
        %v501 = vunpack.c.l.b16 %v477
        %v502 = vunpack.c.l.b16 %v478
        %v503 = vunpack.c.l.b16 %v479
        %v504 = vunpack.c.l.b16 %v480
        %v505 = vpack.c.b16 %v502, %v501
        %v506 = vpack.c.b16 %v504, %v503
        %v525 = vunpack.c.l.b16 %v481
        %v526 = vunpack.c.h.b16 %v481
        %v527 = vunpack.c.l.b16 %v482
        %v528 = vunpack.c.h.b16 %v482
        %v529 = vunpack.c.l.b16 %v483
        %v530 = vunpack.c.h.b16 %v483
        %v531 = vunpack.c.l.b16 %v484
        %v532 = vunpack.c.h.b16 %v484
        %v533 = vunpack.c.l.b16 %v485
        %v534 = vunpack.c.h.b16 %v485
        %v535 = vunpack.c.l.b16 %v486
        %v536 = vunpack.c.h.b16 %v486
        %v537 = vunpack.c.l.b16 %v487
        %v538 = vunpack.c.h.b16 %v487
        %v539 = vunpack.c.l.b16 %v488
        %v540 = vunpack.c.h.b16 %v488
        %v541 = vunpack.c.l.b16 %v489
        %v542 = vunpack.c.h.b16 %v489
        %v543 = vunpack.c.l.b16 %v490
        %v544 = vunpack.c.h.b16 %v490
        %v545 = vunpack.c.l.b16 %v491
        %v546 = vunpack.c.h.b16 %v491
        %v547 = vunpack.c.l.b16 %v492
        %v548 = vunpack.c.h.b16 %v492
        %v549 = vunpack.c.l.b16 %v493
        %v550 = vunpack.c.h.b16 %v493
        %v551 = vunpack.c.l.b16 %v494
        %v552 = vunpack.c.h.b16 %v494
        %v553 = vunpack.c.l.b16 %v495
        %v554 = vunpack.c.h.b16 %v495
        %v555 = vunpack.c.l.b16 %v496
        %v556 = vunpack.c.h.b16 %v496
        %v557 = vpack.c.b16 %v527, %v525
        %v558 = vpack.c.b16 %v528, %v526
        %v559 = vpack.c.b16 %v531, %v529
        %v560 = vpack.c.b16 %v532, %v530
        %v561 = vpack.c.b16 %v535, %v533
        %v562 = vpack.c.b16 %v536, %v534
        %v563 = vpack.c.b16 %v539, %v537
        %v564 = vpack.c.b16 %v540, %v538
        %v565 = vpack.c.b16 %v543, %v541
        %v566 = vpack.c.b16 %v544, %v542
        %v567 = vpack.c.b16 %v547, %v545
        %v568 = vpack.c.b16 %v548, %v546
        %v569 = vpack.c.b16 %v551, %v549
        %v570 = vpack.c.b16 %v552, %v550
        %v571 = vpack.c.b16 %v555, %v553
        %v572 = vpack.c.b16 %v556, %v554
        %589 = vmatpush.bf16.msra.mxu0 %v571
        %590 = vmatpush.bf16.msra.mxu0 %v569
        %591 = vmatpush.bf16.msra.mxu0 %v567
        %592 = vmatpush.bf16.msra.mxu0 %v565
        %593 = vmatpush.bf16.msra.mxu0 %v563
        %594 = vmatpush.bf16.msra.mxu0 %v561
        %595 = vmatpush.bf16.msra.mxu0 %v559
        %596 = vmatpush.bf16.msra.mxu0 %v557
        %597 = vmatmul.bf16.gmra.mxu0 %v505
        %v598 = vpop.f32.mrf.mxu0
        %v599 = vadd.f32 0.0, %v598
        %v600 = vpop.f32.mrf.mxu0
        %v601 = vadd.f32 0.0, %v600
        %602 = vmatmul.bf16.gmra.mxu0 %v506
        %v603 = vpop.f32.mrf.mxu0
        %v604 = vadd.f32 0.0, %v603
        %v605 = vpop.f32.mrf.mxu0
        %v606 = vadd.f32 0.0, %v605
        %607 = vdwg.mxu0
        %608 = vmatpush.bf16.msra.mxu0 %v572
        %609 = vmatpush.bf16.msra.mxu0 %v570
        %610 = vmatpush.bf16.msra.mxu0 %v568
        %611 = vmatpush.bf16.msra.mxu0 %v566
        %612 = vmatpush.bf16.msra.mxu0 %v564
        %613 = vmatpush.bf16.msra.mxu0 %v562
        %614 = vmatpush.bf16.msra.mxu0 %v560
        %615 = vmatpush.bf16.msra.mxu0 %v558
        %616 = vmatmul.bf16.gmra.mxu0 %v505
        %v617 = vpop.f32.mrf.mxu0
        %v618 = vadd.f32 0.0, %v617
        %v619 = vpop.f32.mrf.mxu0
        %v620 = vadd.f32 0.0, %v619
        %621 = vmatmul.bf16.gmra.mxu0 %v506
        %v622 = vpop.f32.mrf.mxu0
        %v623 = vadd.f32 0.0, %v622
        %v624 = vpop.f32.mrf.mxu0
        %v625 = vadd.f32 0.0, %v624
        %626 = vdwg.mxu0
        %v627 = vadd.f32 %v599, %v423
        %v628 = vadd.f32 %v601, %v423
        %v629 = vadd.f32 %v604, %v423
        %v630 = vadd.f32 %v606, %v423
        %v631 = vadd.f32 %v627, 1.0
        %v632 = vadd.f32 %v628, 1.0
        %v633 = vadd.f32 %v629, 1.0
        %v634 = vadd.f32 %v630, 1.0
        %v635 = vmul.f32 %v473, %v631
        %v636 = vmul.f32 %v474, %v632
        %v637 = vmul.f32 %v475, %v633
        %v638 = vmul.f32 %v476, %v634
        %v639 = vadd.f32 %v635, %v637
        %v640 = vadd.f32 %v636, %v638
        %v641 = vpack.c.bf16 %v640, %v639
        %v642 = vld [vmem:[#allocation4] sm:$0xf]
        %v643 = vld [vmem:[#allocation4 + $0x4] sm:$0xf]
        %v644 = vld [vmem:[#allocation4 + $0x8] sm:$0xf]
        %v645 = vld [vmem:[#allocation4 + $0xc] sm:$0xf]
        %v646 = vld [vmem:[#allocation4 + $0x10] sm:$0xf]
        %v647 = vld [vmem:[#allocation4 + $0x14] sm:$0xf]
        %v648 = vld [vmem:[#allocation4 + $0x18] sm:$0xf]
        %v649 = vld [vmem:[#allocation4 + $0x1c] sm:$0xf]
        %v650 = vld [vmem:[#allocation4 + $0x20] sm:$0xf]
        %v651 = vld [vmem:[#allocation4 + $0x24] sm:$0xf]
        %v652 = vld [vmem:[#allocation4 + $0x28] sm:$0xf]
        %v653 = vld [vmem:[#allocation4 + $0x2c] sm:$0xf]
        %v654 = vld [vmem:[#allocation4 + $0x30] sm:$0xf]
        %v655 = vld [vmem:[#allocation4 + $0x34] sm:$0xf]
        %v656 = vld [vmem:[#allocation4 + $0x38] sm:$0xf]
        %v657 = vld [vmem:[#allocation4 + $0x3c] sm:$0xf]
        %v674 = vunpack.c.l.b16 %v642
        %v675 = vunpack.c.l.b16 %v643
        %v676 = vunpack.c.l.b16 %v644
        %v677 = vunpack.c.l.b16 %v645
        %v678 = vunpack.c.l.b16 %v646
        %v679 = vunpack.c.l.b16 %v647
        %v680 = vunpack.c.l.b16 %v648
        %v681 = vunpack.c.l.b16 %v649
        %v682 = vunpack.c.l.b16 %v650
        %v683 = vunpack.c.l.b16 %v651
        %v684 = vunpack.c.l.b16 %v652
        %v685 = vunpack.c.l.b16 %v653
        %v686 = vunpack.c.l.b16 %v654
        %v687 = vunpack.c.l.b16 %v655
        %v688 = vunpack.c.l.b16 %v656
        %v689 = vunpack.c.l.b16 %v657
        %v690 = vpack.c.b16 %v675, %v674
        %v691 = vpack.c.b16 %v677, %v676
        %v692 = vpack.c.b16 %v679, %v678
        %v693 = vpack.c.b16 %v681, %v680
        %v694 = vpack.c.b16 %v683, %v682
        %v695 = vpack.c.b16 %v685, %v684
        %v696 = vpack.c.b16 %v687, %v686
        %v697 = vpack.c.b16 %v689, %v688
        %706 = vmatpush.bf16.msra.mxu0 %v697
        %707 = vmatpush.bf16.msra.mxu0 %v696
        %708 = vmatpush.bf16.msra.mxu0 %v695
        %709 = vmatpush.bf16.msra.mxu0 %v694
        %710 = vmatpush.bf16.msra.mxu0 %v693
        %711 = vmatpush.bf16.msra.mxu0 %v692
        %712 = vmatpush.bf16.msra.mxu0 %v691
        %713 = vmatpush.bf16.msra.mxu0 %v690
        %714 = vmatmul.bf16.gmra.mxu0 %v641
        %v715 = vpop.f32.mrf.mxu0
        %v716 = vadd.f32 0.0, %v715
        %v717 = vpop.f32.mrf.mxu0
        %v718 = vadd.f32 0.0, %v717
        %719 = vdwg.mxu0
        %v720 = vadd.f32 %v618, %v716
        %v721 = vadd.f32 %v620, %v718
        %v722 = vadd.f32 %v623, %v716
        %v723 = vadd.f32 %v625, %v718
        %v725 = vperm.slane %v326, 0
        %v727 = vadd.f32 %v720, %v725
        %v728 = vadd.f32 %v721, %v725
        %v729 = vadd.f32 %v722, %v725
        %v730 = vadd.f32 %v723, %v725
        %v731 = vmul.f32 %v627, %v727
        %v732 = vmul.f32 %v628, %v728
        %v733 = vmul.f32 %v629, %v729
        %v734 = vmul.f32 %v630, %v730
        %v735 = vadd.f32 %v731, 1.0
        %v736 = vadd.f32 %v732, 1.0
        %v737 = vadd.f32 %v733, 1.0
        %v738 = vadd.f32 %v734, 1.0
        %v739 = vmul.f32 %v473, %v735
        %v740 = vmul.f32 %v474, %v736
        %v741 = vmul.f32 %v475, %v737
        %v742 = vmul.f32 %v476, %v738
        %v743 = vadd.f32 %v739, %v741
        %v744 = vadd.f32 %v740, %v742
        %v745 = vld [vmem:[%s311] sm:$0xff]
        %v746 = vadd.f32 %v743, %v744
        %v747 = vadd.f32 %v745, %v746
        %748 = vst [vmem:[%s311] sm:$0xff] %v747
        %p749 = scmp.lt.s32.totalorder %s23, 1
        %s750 = scalar_select %p749, %s23, 1
        %s751 = smul.addr %s750, 8
        %s752 = scalar_lea.vmem %s6, %s751
        // Predicated region
        $region57: #{se_resnext50_spatial_image_head.1} parent=43 // pred_check
          %p753 = pneg %p182
        $region58: #{se_resnext50_spatial_image_head.1} parent=43 // pred_check_branch
          %755 = sbr.rel (%p753) target = $region60
        $region59: #{se_resnext50_spatial_image_head.1} parent=43 // pred_region
          _
        $region60: #{se_resnext50_spatial_image_head.1} parent=43 // pred_fallthru
          _
      $region44: #{se_resnext50_spatial_image_head.1} parent=5 // pred_fallthru
        _
      %p756 = scmp.le.s32.totalorder 2, %s14
      // Predicated region
      $region61: #{se_resnext50_spatial_image_head.1} parent=5 // pred_check
        %p757 = pneg %p756
      $region62: #{se_resnext50_spatial_image_head.1} parent=5 // pred_check_branch
        %759 = sbr.rel (%p757) target = $region64
      $region63: #{se_resnext50_spatial_image_head.1} parent=5 // pred_region
        %s760 = ssub.s32 %s14, 2
        // Predicated region
        $region65: #{se_resnext50_spatial_image_head.1} parent=63 // pred_check
          %p761 = pneg %p188
        $region66: #{se_resnext50_spatial_image_head.1} parent=63 // pred_check_branch
          %763 = sbr.rel (%p761) target = $region68
        $region67: #{se_resnext50_spatial_image_head.1} parent=63 // pred_region
          %p764 = scmp.lt.s32.totalorder %s25, 1
          %s765 = scalar_select %p764, %s25, 1
          %s766 = smul.addr %s765, 8
          %s767 = scalar_lea.vmem %s6, %s766
        $region68: #{se_resnext50_spatial_image_head.1} parent=63 // pred_fallthru
          _
      $region64: #{se_resnext50_spatial_image_head.1} parent=5 // pred_fallthru
        _
    $region6: #{se_resnext50_spatial_image_head.1} parent=1 // loop_footer
      %s18 = sadd.s32 1, %s14
    $region7: #{se_resnext50_spatial_image_head.1} parent=1 // loop_footer_branch
      %13 = sbr.rel target = $region3
    $region8: #{se_resnext50_spatial_image_head.1} parent=1 // loop_exit
      _
    %768 = vsyncpa [#allocation3], 1
    %s769 = scalar_lea.sflag [#allocation3], 1
    %770 = vsyncpa %s769, 1
    %771 = vsyncpa [#allocation5], 1

</llo_original>
